<compile_context>
chip_gen: v7x
topology: tpu7x:2x2x1
jax: 0.10.0
libtpu: 0.0.40
codegen_flags: <defaults>
</compile_context>

<pallas_src>
import functools

import jax
import jax.numpy as jnp
from jax.experimental import pallas as pl
from jax.experimental.pallas import tpu as pltpu

SLACK = 1e-4     # self.slack
BN_EPS = 1e-5    # nn.BatchNorm1d default eps


def _vmem_spec():
    # whole-array blocks resident in VMEM (all shapes here are tiny)
    return pl.BlockSpec(memory_space=pltpu.MemorySpace.VMEM)


# ------------------------------------------------------------------
# Fused kernel: training-mode BatchNorm1d(observed_dims) over the flattened
# (B, T*D) input, followed by the whole Linear/activation stack.
#   xf:    (B, T*D)   flattened X (column c holds observed dim c % D)
#   e_cd:  (T*D, D)   0/1 selector, e_cd[c, d] = (c % D == d)
#   e_dc:  (D, T*D)   its transpose (re-tiles per-dim stats onto the columns)
#   gamma, beta: (1, D) BN affine parameters
#   then (W_i bf16, b_i f32) pairs, then the output ref (B, N_pad).
# Note: torch BN in train() mode also updates running stats; that is a training
# side effect with no impact on the forward outputs and is not modeled here.
# ------------------------------------------------------------------
def _make_fused_kernel(n_layers, activations, inv_n):
    def kernel(xf_ref, e_cd_ref, e_dc_ref, gamma_ref, beta_ref, *refs):
        o_ref = refs[-1]
        wb = refs[:-1]

        xf = xf_ref[...]                                          # (B, T*D) f32

        # ---- BatchNorm1d batch statistics (single pass, biased var like torch) ----
        colsum = jnp.sum(xf, axis=0, keepdims=True)               # (1, T*D)
        colsq = jnp.sum(xf * xf, axis=0, keepdims=True)           # (1, T*D)
        d_sum = jnp.dot(colsum, e_cd_ref[...], preferred_element_type=jnp.float32)
        d_sq = jnp.dot(colsq, e_cd_ref[...], preferred_element_type=jnp.float32)
        mean = d_sum * inv_n                                      # (1, D)
        var = d_sq * inv_n - mean * mean                          # (1, D)
        scale = gamma_ref[...] * jax.lax.rsqrt(var + BN_EPS)      # (1, D)  (EUP rsqrt)
        shift = beta_ref[...] - mean * scale                      # (1, D)
        # re-tile per-dim scale/shift onto the (B, T*D) column layout
        scale_t = jnp.dot(scale, e_dc_ref[...], preferred_element_type=jnp.float32)
        shift_t = jnp.dot(shift, e_dc_ref[...], preferred_element_type=jnp.float32)
        h = xf * scale_t + shift_t                                # == flatten(BN(X)), (B, T*D)

        # ---- fused Linear/activation stack: bf16 at the MXU, f32 accumulate ----
        for li in range(n_layers):
            w = wb[2 * li][...]                                   # (K, N) bf16
            b = wb[2 * li + 1][...]                               # (1, N) f32
            h = jnp.dot(h.astype(w.dtype), w,
                        preferred_element_type=jnp.float32) + b
            act = activations[li]
            if act is not None:
                h = act(h)                                        # f32 on the VPU/EUP

        o_ref[...] = h.astype(o_ref.dtype)                        # lane-dense unmasked vst

    return kernel


def fused_bn_mlp(xf, e_cd, e_dc, gamma, beta, weights, biases, activations, n_rows):
    args = [xf, e_cd, e_dc, gamma, beta]
    for w, b in zip(weights, biases):
        args += [w, b]
    out_dim = weights[-1].shape[1]
    kernel = _make_fused_kernel(len(weights), tuple(activations), 1.0 / float(n_rows))
    return pl.pallas_call(
        kernel,
        out_shape=jax.ShapeDtypeStruct((xf.shape[0], out_dim), jnp.float32),
        in_specs=[_vmem_spec()] * len(args),
        out_specs=_vmem_spec(),
    )(*args)


# ------------------------------------------------------------------
# Full forward.  Heavy compute (BN + MLP) in the single Pallas kernel; the raw
# reshape(2, B, T, L) / slicing and the diag_embed are trivial XLA glue on the
# kernel output (contiguous slice/reshape + fused broadcast multiply).
# ------------------------------------------------------------------
def encoder_forward(X, taus, gamma, beta, weights, biases, activations):
    B, T, D = X.shape
    L = taus.shape[0]
    TD = T * D
    out_dim = weights[-1].shape[1]                                 # 2*T*L

    xf = X.reshape(B, TD)                      # flatten(BN(X)) layout (free reshape)

    # Fold taus into the first-layer bias (batch-invariant -> hoisted out of the kernel).
    W0, b0 = weights[0], biases[0]
    b0_eff = b0 + jnp.dot(taus[None, :], W0[TD:, :],
                          precision=jax.lax.Precision.HIGHEST)    # (1, H1)
    w_list = [W0[:TD, :]] + list(weights[1:])
    b_list = [b0_eff] + list(biases[1:])

    # Lane-dense output: pad the final layer's N to a multiple of 128 so the
    # kernel's only output store is an unmasked, full-lane vst.  Padded columns
    # are exact zeros and are sliced off below.
    n_pad = ((out_dim + 127) // 128) * 128
    if n_pad != out_dim:
        w_list[-1] = jnp.pad(w_list[-1], ((0, 0), (0, n_pad - out_dim)))
        b_list[-1] = jnp.pad(b_list[-1], ((0, 0), (0, n_pad - out_dim)))

    w_bf16 = [w.astype(jnp.bfloat16) for w in w_list]             # bf16 only at the MXU

    # 0/1 selectors: flattened column c = t*D + d belongs to observed dim d = c % D.
    e_cd = jnp.tile(jnp.eye(D, dtype=jnp.float32), (T, 1))        # (T*D, D)
    e_dc = e_cd.T                                                 # (D, T*D)

    out_p = fused_bn_mlp(xf, e_cd, e_dc,
                         gamma.reshape(1, D), beta.reshape(1, D),
                         w_bf16, b_list, activations, n_rows=B * T)  # (B, n_pad)
    out = out_p[:, :out_dim]                                       # (B, 2*T*L)

    # Replicate torch's raw reshape(2, B, T, L) + slicing exactly.
    om = out.reshape(2, B, T, L)
    means = om[0]
    sds = om[1]

    # corr[b, i, j, l] = (i == j) * (sds[b, i, l]^2 + slack)
    # == stack_b(diag_embed(sds[b].T**2 + slack)).permute(0, 2, 3, 1)
    sq = sds * sds + SLACK
    eye_t = jnp.eye(T, dtype=out.dtype)
    corr_sds = eye_t[None, :, :, None] * sq[:, :, None, :]
    return means, corr_sds


# ------------------------------------------------------------------
# Pure-JAX f32 reference mirroring the PyTorch forward, for validation.
# ------------------------------------------------------------------
def reference_forward(X, taus, gamma, beta, weights, biases, activations):
    B, T, D = X.shape
    L = taus.shape[0]
    xp = jnp.transpose(X, (0, 2, 1))                              # (B, D, T)
    mean = jnp.mean(xp, axis=(0, 2), keepdims=True)
    var = jnp.mean((xp - mean) ** 2, axis=(0, 2), keepdims=True)
    xn = (xp - mean) / jnp.sqrt(var + BN_EPS) * gamma[None, :, None] + beta[None, :, None]
    Xb = jnp.transpose(xn, (0, 2, 1))
    flat = Xb.reshape(B, T * D)
    h = jnp.concatenate([flat, jnp.broadcast_to(taus[None, :], (B, L))], axis=1)
    for w, b, a in zip(weights, biases, activations):
        h = jnp.dot(h, w, precision=jax.lax.Precision.HIGHEST) + b
        if a is not None:
            h = a(h)
    om = h.reshape(2, B, T, L)
    means = om[0]
    sds = om[1]
    sq = sds ** 2 + SLACK
    eye = jnp.eye(T, dtype=sds.dtype)
    corr = eye[None, :, :, None] * sq[:, :, None, :]
    return means, corr


if __name__ == "__main__":
    # X: (batch, timesteps, observed_dims), taus: (latent_dims,)
    B, T, D_obs, L = 8, 8, 4, 3
    layers_list = [(32, jnp.tanh), (16, lambda x: jnp.maximum(x, 0.0))]
    in_dim = D_obs * T + L            # flattened_input_dims
    out_dim = L * T * 2               # flattened_output_dims
    sizes = [in_dim] + [s for s, _ in layers_list] + [out_dim]
    activations = [a for _, a in layers_list] + [None]

    keys = iter(jax.random.split(jax.random.PRNGKey(0), 16))
    X = jax.random.normal(next(keys), (B, T, D_obs), jnp.float32)
    taus = jax.random.normal(next(keys), (L,), jnp.float32)
    gamma = 1.0 + 0.1 * jax.random.normal(next(keys), (D_obs,), jnp.float32)
    beta = 0.1 * jax.random.normal(next(keys), (D_obs,), jnp.float32)

    weights, biases = [], []
    for fin, fout in zip(sizes[:-1], sizes[1:]):
        weights.append(0.1 * jax.random.normal(next(keys), (fin, fout), jnp.float32))
        biases.append(0.01 * jax.random.normal(next(keys), (1, fout), jnp.float32))

    # jit the wrapper so the bias folding / padding / eye-multiply glue fuses
    # around the single pallas_call.
    fwd = jax.jit(functools.partial(encoder_forward, activations=activations))
    means, corr_sds = fwd(X, taus, gamma, beta, weights, biases)
    jax.block_until_ready((means, corr_sds))

    ref_means, ref_corr = reference_forward(X, taus, gamma, beta, weights, biases, activations)
    assert means.shape == (B, T, L) and corr_sds.shape == (B, T, T, L)
    # bf16-at-the-MXU numerics => ~0.5-1% relative error vs the f32/HIGHEST reference
    assert jnp.allclose(means, ref_means, rtol=3e-2, atol=3e-3)
    assert jnp.allclose(corr_sds, ref_corr, rtol=3e-2, atol=3e-3)

    print("KERNEL_OK")
</pallas_src>

<mosaic_0001>
module attributes {stable_mosaic.version = 11 : i64} {
  func.func @kernel(%arg0: memref<8x32xf32, #tpu.memory_space<vmem>>, %arg1: memref<32x4xf32, #tpu.memory_space<vmem>>, %arg2: memref<4x32xf32, #tpu.memory_space<vmem>>, %arg3: memref<1x4xf32, #tpu.memory_space<vmem>>, %arg4: memref<1x4xf32, #tpu.memory_space<vmem>>, %arg5: memref<32x32xbf16, #tpu.memory_space<vmem>>, %arg6: memref<1x32xf32, #tpu.memory_space<vmem>>, %arg7: memref<32x16xbf16, #tpu.memory_space<vmem>>, %arg8: memref<1x16xf32, #tpu.memory_space<vmem>>, %arg9: memref<16x128xbf16, #tpu.memory_space<vmem>>, %arg10: memref<1x128xf32, #tpu.memory_space<vmem>>, %arg11: memref<8x128xf32, #tpu.memory_space<vmem>>) attributes {dimension_semantics = [], scalar_prefetch = 0 : i64, scratch_operands = 0 : i64, tpu.core_type = #tpu.core_type<tc>} {
    %c0 = arith.constant 0 : index
    %c0_0 = arith.constant 0 : index
    %0 = vector.load %arg0[%c0, %c0_0] : memref<8x32xf32, #tpu.memory_space<vmem>>, vector<8x32xf32>
    %cst = arith.constant dense<0.000000e+00> : vector<32xf32>
    %1 = vector.multi_reduction <add>, %0, %cst [0] : vector<8x32xf32> to vector<32xf32>
    %2 = vector.shape_cast %1 : vector<32xf32> to vector<1x32xf32>
    %3 = arith.mulf %0, %0 : vector<8x32xf32>
    %cst_1 = arith.constant dense<0.000000e+00> : vector<32xf32>
    %4 = vector.multi_reduction <add>, %3, %cst_1 [0] : vector<8x32xf32> to vector<32xf32>
    %5 = vector.shape_cast %4 : vector<32xf32> to vector<1x32xf32>
    %c0_2 = arith.constant 0 : index
    %c0_3 = arith.constant 0 : index
    %6 = vector.load %arg1[%c0_2, %c0_3] : memref<32x4xf32, #tpu.memory_space<vmem>>, vector<32x4xf32>
    %cst_4 = arith.constant dense<0.000000e+00> : vector<1x4xf32>
    %7 = tpu.matmul %2, %6, %cst_4 {dimension_numbers = #tpu.dot_dimension_numbers<[1], [0], [0], [1], [0, 0, 1, 1], [], []>} : vector<1x32xf32>, vector<32x4xf32>, vector<1x4xf32> -> vector<1x4xf32>
    %c0_5 = arith.constant 0 : index
    %c0_6 = arith.constant 0 : index
    %8 = vector.load %arg1[%c0_5, %c0_6] : memref<32x4xf32, #tpu.memory_space<vmem>>, vector<32x4xf32>
    %cst_7 = arith.constant dense<0.000000e+00> : vector<1x4xf32>
    %9 = tpu.matmul %5, %8, %cst_7 {dimension_numbers = #tpu.dot_dimension_numbers<[1], [0], [0], [1], [0, 0, 1, 1], [], []>} : vector<1x32xf32>, vector<32x4xf32>, vector<1x4xf32> -> vector<1x4xf32>
    %cst_8 = arith.constant 1.562500e-02 : f32
    %10 = vector.broadcast %cst_8 : f32 to vector<1x4xf32>
    %11 = arith.mulf %7, %10 : vector<1x4xf32>
    %cst_9 = arith.constant 1.562500e-02 : f32
    %12 = vector.broadcast %cst_9 : f32 to vector<1x4xf32>
    %13 = arith.mulf %9, %12 : vector<1x4xf32>
    %14 = arith.mulf %11, %11 : vector<1x4xf32>
    %15 = arith.subf %13, %14 : vector<1x4xf32>
    %c0_10 = arith.constant 0 : index
    %c0_11 = arith.constant 0 : index
    %16 = vector.load %arg3[%c0_10, %c0_11] : memref<1x4xf32, #tpu.memory_space<vmem>>, vector<1x4xf32>
    %cst_12 = arith.constant 9.99999974E-6 : f32
    %17 = vector.broadcast %cst_12 : f32 to vector<1x4xf32>
    %18 = arith.addf %15, %17 : vector<1x4xf32>
    %19 = math.rsqrt %18 : vector<1x4xf32>
    %20 = arith.mulf %16, %19 : vector<1x4xf32>
    %c0_13 = arith.constant 0 : index
    %c0_14 = arith.constant 0 : index
    %21 = vector.load %arg4[%c0_13, %c0_14] : memref<1x4xf32, #tpu.memory_space<vmem>>, vector<1x4xf32>
    %22 = arith.mulf %11, %20 : vector<1x4xf32>
    %23 = arith.subf %21, %22 : vector<1x4xf32>
    %c0_15 = arith.constant 0 : index
    %c0_16 = arith.constant 0 : index
    %24 = vector.load %arg2[%c0_15, %c0_16] : memref<4x32xf32, #tpu.memory_space<vmem>>, vector<4x32xf32>
    %cst_17 = arith.constant dense<0.000000e+00> : vector<1x32xf32>
    %25 = tpu.matmul %20, %24, %cst_17 {dimension_numbers = #tpu.dot_dimension_numbers<[1], [0], [0], [1], [0, 0, 1, 1], [], []>} : vector<1x4xf32>, vector<4x32xf32>, vector<1x32xf32> -> vector<1x32xf32>
    %c0_18 = arith.constant 0 : index
    %c0_19 = arith.constant 0 : index
    %26 = vector.load %arg2[%c0_18, %c0_19] : memref<4x32xf32, #tpu.memory_space<vmem>>, vector<4x32xf32>
    %cst_20 = arith.constant dense<0.000000e+00> : vector<1x32xf32>
    %27 = tpu.matmul %23, %26, %cst_20 {dimension_numbers = #tpu.dot_dimension_numbers<[1], [0], [0], [1], [0, 0, 1, 1], [], []>} : vector<1x4xf32>, vector<4x32xf32>, vector<1x32xf32> -> vector<1x32xf32>
    %28 = vector.broadcast %25 : vector<1x32xf32> to vector<8x32xf32>
    %29 = arith.mulf %0, %28 : vector<8x32xf32>
    %30 = vector.broadcast %27 : vector<1x32xf32> to vector<8x32xf32>
    %31 = arith.addf %29, %30 : vector<8x32xf32>
    %c0_21 = arith.constant 0 : index
    %c0_22 = arith.constant 0 : index
    %32 = vector.load %arg5[%c0_21, %c0_22] : memref<32x32xbf16, #tpu.memory_space<vmem>>, vector<32x32xbf16>
    %c0_23 = arith.constant 0 : index
    %c0_24 = arith.constant 0 : index
    %33 = vector.load %arg6[%c0_23, %c0_24] : memref<1x32xf32, #tpu.memory_space<vmem>>, vector<1x32xf32>
    %34 = arith.truncf %31 : vector<8x32xf32> to vector<8x32xbf16>
    %cst_25 = arith.constant dense<0.000000e+00> : vector<8x32xf32>
    %35 = tpu.matmul %34, %32, %cst_25 {dimension_numbers = #tpu.dot_dimension_numbers<[1], [0], [0], [1], [0, 0, 1, 1], [], []>} : vector<8x32xbf16>, vector<32x32xbf16>, vector<8x32xf32> -> vector<8x32xf32>
    %36 = vector.broadcast %33 : vector<1x32xf32> to vector<8x32xf32>
    %37 = arith.addf %35, %36 : vector<8x32xf32>
    %38 = math.tanh %37 : vector<8x32xf32>
    %c0_26 = arith.constant 0 : index
    %c0_27 = arith.constant 0 : index
    %39 = vector.load %arg7[%c0_26, %c0_27] : memref<32x16xbf16, #tpu.memory_space<vmem>>, vector<32x16xbf16>
    %c0_28 = arith.constant 0 : index
    %c0_29 = arith.constant 0 : index
    %40 = vector.load %arg8[%c0_28, %c0_29] : memref<1x16xf32, #tpu.memory_space<vmem>>, vector<1x16xf32>
    %41 = arith.truncf %38 : vector<8x32xf32> to vector<8x32xbf16>
    %cst_30 = arith.constant dense<0.000000e+00> : vector<8x16xf32>
    %42 = tpu.matmul %41, %39, %cst_30 {dimension_numbers = #tpu.dot_dimension_numbers<[1], [0], [0], [1], [0, 0, 1, 1], [], []>} : vector<8x32xbf16>, vector<32x16xbf16>, vector<8x16xf32> -> vector<8x16xf32>
    %43 = vector.broadcast %40 : vector<1x16xf32> to vector<8x16xf32>
    %44 = arith.addf %42, %43 : vector<8x16xf32>
    %cst_31 = arith.constant 0.000000e+00 : f32
    %45 = vector.broadcast %cst_31 : f32 to vector<8x16xf32>
    %46 = arith.maximumf %44, %45 : vector<8x16xf32>
    %c0_32 = arith.constant 0 : index
    %c0_33 = arith.constant 0 : index
    %47 = vector.load %arg9[%c0_32, %c0_33] : memref<16x128xbf16, #tpu.memory_space<vmem>>, vector<16x128xbf16>
    %c0_34 = arith.constant 0 : index
    %c0_35 = arith.constant 0 : index
    %48 = vector.load %arg10[%c0_34, %c0_35] : memref<1x128xf32, #tpu.memory_space<vmem>>, vector<1x128xf32>
    %49 = arith.truncf %46 : vector<8x16xf32> to vector<8x16xbf16>
    %cst_36 = arith.constant dense<0.000000e+00> : vector<8x128xf32>
    %50 = tpu.matmul %49, %47, %cst_36 {dimension_numbers = #tpu.dot_dimension_numbers<[1], [0], [0], [1], [0, 0, 1, 1], [], []>} : vector<8x16xbf16>, vector<16x128xbf16>, vector<8x128xf32> -> vector<8x128xf32>
    %51 = vector.broadcast %48 : vector<1x128xf32> to vector<8x128xf32>
    %52 = arith.addf %50, %51 : vector<8x128xf32>
    %c0_37 = arith.constant 0 : index
    %c0_38 = arith.constant 0 : index
    %53 = vector.load %arg11[%c0_37, %c0_38] : memref<8x128xf32, #tpu.memory_space<vmem>>, vector<8x128xf32>
    tpu.vector_store %arg11[%c0_37, %c0_38], %52 {strides = array<i32>} : memref<8x128xf32, #tpu.memory_space<vmem>>, vector<8x128xf32>,
    return
  }
}

</mosaic_0001>

<llo_original>
// kernel: tile.9
$region0: #{tile.9}
  %s0 = inlined_call_operand.vmem [shape: f32[8,4,4], index: 0, kind: input, shape index: {}]
  %s1 = inlined_call_operand.vmem [shape: f32[32,4], index: 1, kind: output, shape index: {}]
  $region1: #{tile.9} parent=0
    #allocation0 [shape = 'u8[4096]{0}', space=vmem, size = 0x1000, scoped, tag = 'scoped mem for output reshape']
    %v2 = vld [vmem:[%s0] ss:$8 sm:$0xf]
    %vm3 = vcmask 31744
    %4 = vst.msk [vmem:[#allocation0] sm:$0xf] %vm3, %v2
    %s5 = scalar_lea.vmem %s0, 7
    %v6 = vld [vmem:[%s5] ss:$8 sm:$0xf]
    %7 = vrot.lane.b32.xlu0 %v6, 28
    %v8 = vpop.permute.xlu0 %7
    %vm9 = vcmask 261344
    %10 = vst.msk [vmem:[#allocation0] sm:$0xf] %vm9, %v8
    %s11 = scalar_lea.vmem %s0, 6
    %v12 = vld [vmem:[%s11] ss:$8 sm:$0xf]
    %13 = vrot.lane.b32.xlu0 %v12, 24
    %v14 = vpop.permute.xlu0 %13
    %vm15 = vcmask 228544
    %16 = vst.msk [vmem:[#allocation0] sm:$0xf] %vm15, %v14
    %s17 = scalar_lea.vmem %s0, 5
    %v18 = vld [vmem:[%s17] ss:$8 sm:$0xf]
    %19 = vrot.lane.b32.xlu0 %v18, 20
    %v20 = vpop.permute.xlu0 %19
    %vm21 = vcmask 195744
    %22 = vst.msk [vmem:[#allocation0] sm:$0xf] %vm21, %v20
    %s23 = scalar_lea.vmem %s0, 4
    %v24 = vld [vmem:[%s23] ss:$8 sm:$0xf]
    %25 = vrot.lane.b32.xlu0 %v24, 16
    %v26 = vpop.permute.xlu0 %25
    %vm27 = vcmask 162944
    %28 = vst.msk [vmem:[#allocation0] sm:$0xf] %vm27, %v26
    %s29 = scalar_lea.vmem %s0, 3
    %v30 = vld [vmem:[%s29] ss:$8 sm:$0xf]
    %31 = vrot.lane.b32.xlu0 %v30, 12
    %v32 = vpop.permute.xlu0 %31
    %vm33 = vcmask 130144
    %34 = vst.msk [vmem:[#allocation0] sm:$0xf] %vm33, %v32
    %s35 = scalar_lea.vmem %s0, 2
    %v36 = vld [vmem:[%s35] ss:$8 sm:$0xf]
    %37 = vrot.lane.b32.xlu0 %v36, 8
    %v38 = vpop.permute.xlu0 %37
    %vm39 = vcmask 97344
    %40 = vst.msk [vmem:[#allocation0] sm:$0xf] %vm39, %v38
    %s41 = scalar_lea.vmem %s0, 1
    %v42 = vld [vmem:[%s41] ss:$8 sm:$0xf]
    %43 = vrot.lane.b32.xlu0 %v42, 4
    %v44 = vpop.permute.xlu0 %43
    %vm45 = vcmask 64544
    %46 = vst.msk [vmem:[#allocation0] sm:$0xf] %vm45, %v44
    %s48 = sshllo.u32 0, 4
    %v50 = vld [vmem:[#allocation0] sm:%s48]
    %s51 = sshllo.u32 0, 4
    %52 = vst [vmem:[%s1] sm:%s51] %v50

// kernel: squeeze.2
$region0: #{squeeze.2}
  %s0 = inlined_call_operand.vmem [shape: f32[4,48], index: 0, kind: input, shape index: {}]
  %s1 = inlined_call_operand.vmem [shape: f32[8,8,3], index: 1, kind: output, shape index: {}]
  $region1: #{squeeze.2} parent=0
    #allocation0 [shape = 'u8[4096]{0}', space=vmem, size = 0x1000, scoped, tag = 'scoped mem for input reshape']
    %s3 = sshllo.u32 0, 4
    %v4 = vld [vmem:[%s0] sm:%s3]
    %5 = vst [vmem:[#allocation0] sm:%s3] %v4
    %v6 = vld [vmem:[#allocation0] sm:$0xf]
    %vm7 = vcmask 23552
    %8 = vst.msk [vmem:[%s1] ss:$16 sm:$0x3] %vm7, %v6
    %9 = vst.msk [vmem:[%s1] ss:$16 sm:$0xc] %vm7, %v6
    %v10 = vld [vmem:[#allocation0] sm:$0xf]
    %11 = vrot.lane.b32.xlu0 %v10, 125
    %v12 = vpop.permute.xlu0 %11
    %vm13 = vcmask 23552
    %s14 = scalar_lea.vmem %s1, 1
    %15 = vst.msk [vmem:[%s14] ss:$16 sm:$0x3] %vm13, %v12
    %s16 = scalar_lea.vmem %s1, 1
    %17 = vst.msk [vmem:[%s16] ss:$16 sm:$0xc] %vm13, %v12
    %v18 = vld [vmem:[#allocation0] sm:$0xf]
    %19 = vrot.lane.b32.xlu0 %v18, 122
    %v20 = vpop.permute.xlu0 %19
    %vm21 = vcmask 23552
    %s22 = scalar_lea.vmem %s1, 2
    %23 = vst.msk [vmem:[%s22] ss:$16 sm:$0x3] %vm21, %v20
    %s24 = scalar_lea.vmem %s1, 2
    %25 = vst.msk [vmem:[%s24] ss:$16 sm:$0xc] %vm21, %v20
    %v26 = vld [vmem:[#allocation0] sm:$0xf]
    %27 = vrot.lane.b32.xlu0 %v26, 119
    %v28 = vpop.permute.xlu0 %27
    %vm29 = vcmask 23552
    %s30 = scalar_lea.vmem %s1, 3
    %31 = vst.msk [vmem:[%s30] ss:$16 sm:$0x3] %vm29, %v28
    %s32 = scalar_lea.vmem %s1, 3
    %33 = vst.msk [vmem:[%s32] ss:$16 sm:$0xc] %vm29, %v28
    %v34 = vld [vmem:[#allocation0] sm:$0xf]
    %35 = vrot.lane.b32.xlu0 %v34, 116
    %v36 = vpop.permute.xlu0 %35
    %vm37 = vcmask 23552
    %s38 = scalar_lea.vmem %s1, 4
    %39 = vst.msk [vmem:[%s38] ss:$16 sm:$0x3] %vm37, %v36
    %s40 = scalar_lea.vmem %s1, 4
    %41 = vst.msk [vmem:[%s40] ss:$16 sm:$0xc] %vm37, %v36
    %v42 = vld [vmem:[#allocation0] sm:$0xf]
    %43 = vrot.lane.b32.xlu0 %v42, 113
    %v44 = vpop.permute.xlu0 %43
    %vm45 = vcmask 23552
    %s46 = scalar_lea.vmem %s1, 5
    %47 = vst.msk [vmem:[%s46] ss:$16 sm:$0x3] %vm45, %v44
    %s48 = scalar_lea.vmem %s1, 5
    %49 = vst.msk [vmem:[%s48] ss:$16 sm:$0xc] %vm45, %v44
    %v50 = vld [vmem:[#allocation0] sm:$0xf]
    %51 = vrot.lane.b32.xlu0 %v50, 110
    %v52 = vpop.permute.xlu0 %51
    %vm53 = vcmask 23552
    %s54 = scalar_lea.vmem %s1, 6
    %55 = vst.msk [vmem:[%s54] ss:$16 sm:$0x3] %vm53, %v52
    %s56 = scalar_lea.vmem %s1, 6
    %57 = vst.msk [vmem:[%s56] ss:$16 sm:$0xc] %vm53, %v52
    %v58 = vld [vmem:[#allocation0] sm:$0xf]
    %59 = vrot.lane.b32.xlu0 %v58, 107
    %v60 = vpop.permute.xlu0 %59
    %vm61 = vcmask 23552
    %s62 = scalar_lea.vmem %s1, 7
    %63 = vst.msk [vmem:[%s62] ss:$16 sm:$0x3] %vm61, %v60
    %s64 = scalar_lea.vmem %s1, 7
    %65 = vst.msk [vmem:[%s64] ss:$16 sm:$0xc] %vm61, %v60
    %v66 = vld [vmem:[#allocation0] sm:$0xf]
    %67 = vrot.lane.b32.xlu0 %v66, 104
    %v68 = vpop.permute.xlu0 %67
    %vm69 = vcmask 23552
    %s70 = scalar_lea.vmem %s1, 8
    %71 = vst.msk [vmem:[%s70] ss:$16 sm:$0x3] %vm69, %v68
    %s72 = scalar_lea.vmem %s1, 8
    %73 = vst.msk [vmem:[%s72] ss:$16 sm:$0xc] %vm69, %v68
    %v74 = vld [vmem:[#allocation0] sm:$0xf]
    %75 = vrot.lane.b32.xlu0 %v74, 101
    %v76 = vpop.permute.xlu0 %75
    %vm77 = vcmask 23552
    %s78 = scalar_lea.vmem %s1, 9
    %79 = vst.msk [vmem:[%s78] ss:$16 sm:$0x3] %vm77, %v76
    %s80 = scalar_lea.vmem %s1, 9
    %81 = vst.msk [vmem:[%s80] ss:$16 sm:$0xc] %vm77, %v76
    %v82 = vld [vmem:[#allocation0] sm:$0xf]
    %83 = vrot.lane.b32.xlu0 %v82, 98
    %v84 = vpop.permute.xlu0 %83
    %vm85 = vcmask 23552
    %s86 = scalar_lea.vmem %s1, 10
    %87 = vst.msk [vmem:[%s86] ss:$16 sm:$0x3] %vm85, %v84
    %s88 = scalar_lea.vmem %s1, 10
    %89 = vst.msk [vmem:[%s88] ss:$16 sm:$0xc] %vm85, %v84
    %v90 = vld [vmem:[#allocation0] sm:$0xf]
    %91 = vrot.lane.b32.xlu0 %v90, 95
    %v92 = vpop.permute.xlu0 %91
    %vm93 = vcmask 23552
    %s94 = scalar_lea.vmem %s1, 11
    %95 = vst.msk [vmem:[%s94] ss:$16 sm:$0x3] %vm93, %v92
    %s96 = scalar_lea.vmem %s1, 11
    %97 = vst.msk [vmem:[%s96] ss:$16 sm:$0xc] %vm93, %v92
    %v98 = vld [vmem:[#allocation0] sm:$0xf]
    %99 = vrot.lane.b32.xlu0 %v98, 92
    %v100 = vpop.permute.xlu0 %99
    %vm101 = vcmask 23552
    %s102 = scalar_lea.vmem %s1, 12
    %103 = vst.msk [vmem:[%s102] ss:$16 sm:$0x3] %vm101, %v100
    %s104 = scalar_lea.vmem %s1, 12
    %105 = vst.msk [vmem:[%s104] ss:$16 sm:$0xc] %vm101, %v100
    %v106 = vld [vmem:[#allocation0] sm:$0xf]
    %107 = vrot.lane.b32.xlu0 %v106, 89
    %v108 = vpop.permute.xlu0 %107
    %vm109 = vcmask 23552
    %s110 = scalar_lea.vmem %s1, 13
    %111 = vst.msk [vmem:[%s110] ss:$16 sm:$0x3] %vm109, %v108
    %s112 = scalar_lea.vmem %s1, 13
    %113 = vst.msk [vmem:[%s112] ss:$16 sm:$0xc] %vm109, %v108
    %v114 = vld [vmem:[#allocation0] sm:$0xf]
    %115 = vrot.lane.b32.xlu0 %v114, 86
    %v116 = vpop.permute.xlu0 %115
    %vm117 = vcmask 23552
    %s118 = scalar_lea.vmem %s1, 14
    %119 = vst.msk [vmem:[%s118] ss:$16 sm:$0x3] %vm117, %v116
    %s120 = scalar_lea.vmem %s1, 14
    %121 = vst.msk [vmem:[%s120] ss:$16 sm:$0xc] %vm117, %v116
    %v122 = vld [vmem:[#allocation0] sm:$0xf]
    %123 = vrot.lane.b32.xlu0 %v122, 83
    %v124 = vpop.permute.xlu0 %123
    %vm125 = vcmask 23552
    %s126 = scalar_lea.vmem %s1, 15
    %127 = vst.msk [vmem:[%s126] ss:$16 sm:$0x3] %vm125, %v124
    %s128 = scalar_lea.vmem %s1, 15
    %129 = vst.msk [vmem:[%s128] ss:$16 sm:$0xc] %vm125, %v124

// kernel: encoder_forward.1
$region0: #{encoder_forward.1}
  #allocation0 [shape = 'u32[]', space=smem, size = 0x4, offset = 0x4, fixed_abs, tag = 'smem constant byte address 0x4 - core index']
  #allocation1 [shape = 'u32[144,128]{1,0:T(1,128)}', space=vmem, size = 0x12000, scoped, tag = 'internal scratch']
  %s0 = inlined_call_operand.vmem [shape: f32[8,32], index: 0, kind: input, shape index: {}]
  %s1 = inlined_call_operand.vmem [shape: f32[32,4], index: 1, kind: input, shape index: {}]
  %s2 = inlined_call_operand.vmem [shape: f32[4,32], index: 2, kind: input, shape index: {}]
  %s3 = inlined_call_operand.vmem [shape: f32[1,4], index: 3, kind: input, shape index: {}]
  %s4 = inlined_call_operand.vmem [shape: f32[1,4], index: 4, kind: input, shape index: {}]
  %s5 = inlined_call_operand.vmem [shape: bf16[32,32], index: 5, kind: input, shape index: {}]
  %s6 = inlined_call_operand.vmem [shape: f32[1,32], index: 6, kind: input, shape index: {}]
  %s7 = inlined_call_operand.vmem [shape: bf16[32,16], index: 7, kind: input, shape index: {}]
  %s8 = inlined_call_operand.vmem [shape: f32[1,16], index: 8, kind: input, shape index: {}]
  %s9 = inlined_call_operand.vmem [shape: bf16[16,128], index: 9, kind: input, shape index: {}]
  %s10 = inlined_call_operand.vmem [shape: f32[1,128], index: 10, kind: input, shape index: {}]
  %s11 = inlined_call_operand.vmem [shape: f32[8,128], index: 11, kind: output, shape index: {}]
  %s12 = sld [smem:[#allocation0]]
  $region54: #{encoder_forward.1} parent=0
    _
  %s14 = ssub.s32 1, %s12
  %s15 = scalar_select 0, %s14, %s12
  // Predicated region
  $region2: #{encoder_forward.1} parent=0 // pred_check
    _
  $region3: #{encoder_forward.1} parent=0 // pred_check_branch
    %17 = sbr.rel (0) target = $region5
  $region4: #{encoder_forward.1} parent=0 // pred_region
    _
  $region5: #{encoder_forward.1} parent=0 // pred_fallthru
    _
  // Predicated region
  $region6: #{encoder_forward.1} parent=0 // pred_check
    _
  $region7: #{encoder_forward.1} parent=0 // pred_check_branch
    %19 = sbr.rel (0) target = $region9
  $region8: #{encoder_forward.1} parent=0 // pred_region
    _
  $region9: #{encoder_forward.1} parent=0 // pred_fallthru
    _
  // Predicated region
  $region10: #{encoder_forward.1} parent=0 // pred_check
    _
  $region11: #{encoder_forward.1} parent=0 // pred_check_branch
    %21 = sbr.rel (0) target = $region13
  $region12: #{encoder_forward.1} parent=0 // pred_region
    _
  $region13: #{encoder_forward.1} parent=0 // pred_fallthru
    _
  // Predicated region
  $region14: #{encoder_forward.1} parent=0 // pred_check
    _
  $region15: #{encoder_forward.1} parent=0 // pred_check_branch
    %23 = sbr.rel (0) target = $region17
  $region16: #{encoder_forward.1} parent=0 // pred_region
    _
  $region17: #{encoder_forward.1} parent=0 // pred_fallthru
    _
  // Predicated region
  $region18: #{encoder_forward.1} parent=0 // pred_check
    _
  $region19: #{encoder_forward.1} parent=0 // pred_check_branch
    %25 = sbr.rel (0) target = $region21
  $region20: #{encoder_forward.1} parent=0 // pred_region
    _
  $region21: #{encoder_forward.1} parent=0 // pred_fallthru
    _
  // Predicated region
  $region22: #{encoder_forward.1} parent=0 // pred_check
    _
  $region23: #{encoder_forward.1} parent=0 // pred_check_branch
    %27 = sbr.rel (0) target = $region25
  $region24: #{encoder_forward.1} parent=0 // pred_region
    _
  $region25: #{encoder_forward.1} parent=0 // pred_fallthru
    _
  // Predicated region
  $region26: #{encoder_forward.1} parent=0 // pred_check
    _
  $region27: #{encoder_forward.1} parent=0 // pred_check_branch
    %29 = sbr.rel (0) target = $region29
  $region28: #{encoder_forward.1} parent=0 // pred_region
    _
  $region29: #{encoder_forward.1} parent=0 // pred_fallthru
    _
  // Predicated region
  $region30: #{encoder_forward.1} parent=0 // pred_check
    _
  $region31: #{encoder_forward.1} parent=0 // pred_check_branch
    %31 = sbr.rel (0) target = $region33
  $region32: #{encoder_forward.1} parent=0 // pred_region
    _
  $region33: #{encoder_forward.1} parent=0 // pred_fallthru
    _
  // Predicated region
  $region34: #{encoder_forward.1} parent=0 // pred_check
    _
  $region35: #{encoder_forward.1} parent=0 // pred_check_branch
    %33 = sbr.rel (0) target = $region37
  $region36: #{encoder_forward.1} parent=0 // pred_region
    _
  $region37: #{encoder_forward.1} parent=0 // pred_fallthru
    _
  // Predicated region
  $region38: #{encoder_forward.1} parent=0 // pred_check
    _
  $region39: #{encoder_forward.1} parent=0 // pred_check_branch
    %35 = sbr.rel (0) target = $region41
  $region40: #{encoder_forward.1} parent=0 // pred_region
    _
  $region41: #{encoder_forward.1} parent=0 // pred_fallthru
    _
  // Predicated region
  $region42: #{encoder_forward.1} parent=0 // pred_check
    _
  $region43: #{encoder_forward.1} parent=0 // pred_check_branch
    %37 = sbr.rel (0) target = $region45
  $region44: #{encoder_forward.1} parent=0 // pred_region
    _
  $region45: #{encoder_forward.1} parent=0 // pred_fallthru
    _
  %v39 = vld [vmem:[%s0] sm:$0xff]
  %vm40 = vcmask 261120
  %v41 = vsel %vm40, %v39, 0.0
  %v42 = vrot.slane %v41, 4
  %v43 = vadd.f32 %v41, %v42
  %v44 = vrot.slane %v43, 2
  %v45 = vadd.f32 %v43, %v44
  %v46 = vrot.slane %v45, 1
  %v47 = vadd.f32 %v45, %v46
  %v48 = vmul.f32 %v39, %v39
  %v49 = vsel %vm40, %v48, 0.0
  %v50 = vrot.slane %v49, 4
  %v51 = vadd.f32 %v49, %v50
  %v52 = vrot.slane %v51, 2
  %v53 = vadd.f32 %v51, %v52
  %v54 = vrot.slane %v53, 1
  %v55 = vadd.f32 %v53, %v54
  %v56 = vld [vmem:[%s1] sm:$0xff]
  %v57 = vld [vmem:[%s1 + $0x8] sm:$0xff]
  %v58 = vld [vmem:[%s1 + $0x10] sm:$0xff]
  %v59 = vld [vmem:[%s1 + $0x18] sm:$0xff]
  %v61 = vsel %vm40, %v47, 0
  %63 = vmatprep.subr.mxu0 0.0
  %64 = vmatpush1.msra.mxu0 %v56
  %65 = vmatprep.subr.mxu0 0.0
  %66 = vmatpush1.msra.mxu0 %v57
  %67 = vmatprep.subr.mxu0 0.0
  %68 = vmatpush1.msra.mxu0 %v58
  %69 = vmatprep.subr.mxu0 0.0
  %70 = vmatpush1.msra.mxu0 %v59
  %71 = vmatprep.subr.mxu0 0.0
  %72 = vmatpush1.msra.mxu0 0.0
  %73 = vmatprep.subr.mxu0 0.0
  %74 = vmatpush1.msra.mxu0 0.0
  %75 = vmatprep.subr.mxu0 0.0
  %76 = vmatpush1.msra.mxu0 0.0
  %77 = vmatprep.subr.mxu0 0.0
  %78 = vmatpush1.msra.mxu0 0.0
  %79 = vmatprep.subr.mxu0 0.0
  %80 = vmatpush1.msra.mxu0 0.0
  %81 = vmatprep.subr.mxu0 0.0
  %82 = vmatpush1.msra.mxu0 0.0
  %83 = vmatprep.subr.mxu0 0.0
  %84 = vmatpush1.msra.mxu0 0.0
  %85 = vmatprep.subr.mxu0 0.0
  %86 = vmatpush1.msra.mxu0 0.0
  %87 = vmatprep.subr.mxu0 0.0
  %88 = vmatpush1.msra.mxu0 0.0
  %89 = vmatprep.subr.mxu0 0.0
  %90 = vmatpush1.msra.mxu0 0.0
  %91 = vmatprep.subr.mxu0 0.0
  %92 = vmatpush1.msra.mxu0 0.0
  %93 = vmatprep.subr.mxu0 0.0
  %94 = vmatpush1.msra.mxu0 0.0
  %95 = vmatprep.subr.mxu0 0.0
  %96 = vmatpush1.msra.mxu0 0.0
  %97 = vmatprep.subr.mxu0 0.0
  %98 = vmatpush1.msra.mxu0 0.0
  %99 = vmatprep.subr.mxu0 0.0
  %100 = vmatpush1.msra.mxu0 0.0
  %101 = vmatprep.subr.mxu0 0.0
  %102 = vmatpush1.msra.mxu0 0.0
  %103 = vmatprep.subr.mxu0 0.0
  %104 = vmatpush1.msra.mxu0 0.0
  %105 = vmatprep.subr.mxu0 0.0
  %106 = vmatpush1.msra.mxu0 0.0
  %107 = vmatprep.subr.mxu0 0.0
  %108 = vmatpush1.msra.mxu0 0.0
  %109 = vmatprep.subr.mxu0 0.0
  %110 = vmatpush1.msra.mxu0 0.0
  %111 = vmatprep.subr.mxu0 0.0
  %112 = vmatpush1.msra.mxu0 0.0
  %113 = vmatprep.subr.mxu0 0.0
  %114 = vmatpush1.msra.mxu0 0.0
  %115 = vmatprep.subr.mxu0 0.0
  %116 = vmatpush1.msra.mxu0 0.0
  %117 = vmatprep.subr.mxu0 0.0
  %118 = vmatpush1.msra.mxu0 0.0
  %119 = vmatprep.subr.mxu0 0.0
  %120 = vmatpush1.msra.mxu0 0.0
  %121 = vmatprep.subr.mxu0 0.0
  %122 = vmatpush1.msra.mxu0 0.0
  %123 = vmatprep.subr.mxu0 0.0
  %124 = vmatpush1.msra.mxu0 0.0
  %125 = vmatprep.subr.mxu0 0.0
  %126 = vmatpush1.msra.mxu0 0.0
  %127 = vmatprep.mubr.f32.mxu0 0.0
  %128 = vmatmul.mubr.f32.gmra.mrb[0].mxu0 %v61
  %v129 = vpop.f32.mrb[0].mxu0
  %v130 = vadd.f32 0.0, %v129
  %v131 = vpop.f32.mrb[0].mxu0
  %132 = vdwg.mxu0
  %v134 = vsel %vm40, %v55, 0
  %136 = vmatprep.subr.mxu0 0.0
  %137 = vmatpush1.msra.mxu0 %v56
  %138 = vmatprep.subr.mxu0 0.0
  %139 = vmatpush1.msra.mxu0 %v57
  %140 = vmatprep.subr.mxu0 0.0
  %141 = vmatpush1.msra.mxu0 %v58
  %142 = vmatprep.subr.mxu0 0.0
  %143 = vmatpush1.msra.mxu0 %v59
  %144 = vmatprep.subr.mxu0 0.0
  %145 = vmatpush1.msra.mxu0 0.0
  %146 = vmatprep.subr.mxu0 0.0
  %147 = vmatpush1.msra.mxu0 0.0
  %148 = vmatprep.subr.mxu0 0.0
  %149 = vmatpush1.msra.mxu0 0.0
  %150 = vmatprep.subr.mxu0 0.0
  %151 = vmatpush1.msra.mxu0 0.0
  %152 = vmatprep.subr.mxu0 0.0
  %153 = vmatpush1.msra.mxu0 0.0
  %154 = vmatprep.subr.mxu0 0.0
  %155 = vmatpush1.msra.mxu0 0.0
  %156 = vmatprep.subr.mxu0 0.0
  %157 = vmatpush1.msra.mxu0 0.0
  %158 = vmatprep.subr.mxu0 0.0
  %159 = vmatpush1.msra.mxu0 0.0
  %160 = vmatprep.subr.mxu0 0.0
  %161 = vmatpush1.msra.mxu0 0.0
  %162 = vmatprep.subr.mxu0 0.0
  %163 = vmatpush1.msra.mxu0 0.0
  %164 = vmatprep.subr.mxu0 0.0
  %165 = vmatpush1.msra.mxu0 0.0
  %166 = vmatprep.subr.mxu0 0.0
  %167 = vmatpush1.msra.mxu0 0.0
  %168 = vmatprep.subr.mxu0 0.0
  %169 = vmatpush1.msra.mxu0 0.0
  %170 = vmatprep.subr.mxu0 0.0
  %171 = vmatpush1.msra.mxu0 0.0
  %172 = vmatprep.subr.mxu0 0.0
  %173 = vmatpush1.msra.mxu0 0.0
  %174 = vmatprep.subr.mxu0 0.0
  %175 = vmatpush1.msra.mxu0 0.0
  %176 = vmatprep.subr.mxu0 0.0
  %177 = vmatpush1.msra.mxu0 0.0
  %178 = vmatprep.subr.mxu0 0.0
  %179 = vmatpush1.msra.mxu0 0.0
  %180 = vmatprep.subr.mxu0 0.0
  %181 = vmatpush1.msra.mxu0 0.0
  %182 = vmatprep.subr.mxu0 0.0
  %183 = vmatpush1.msra.mxu0 0.0
  %184 = vmatprep.subr.mxu0 0.0
  %185 = vmatpush1.msra.mxu0 0.0
  %186 = vmatprep.subr.mxu0 0.0
  %187 = vmatpush1.msra.mxu0 0.0
  %188 = vmatprep.subr.mxu0 0.0
  %189 = vmatpush1.msra.mxu0 0.0
  %190 = vmatprep.subr.mxu0 0.0
  %191 = vmatpush1.msra.mxu0 0.0
  %192 = vmatprep.subr.mxu0 0.0
  %193 = vmatpush1.msra.mxu0 0.0
  %194 = vmatprep.subr.mxu0 0.0
  %195 = vmatpush1.msra.mxu0 0.0
  %196 = vmatprep.subr.mxu0 0.0
  %197 = vmatpush1.msra.mxu0 0.0
  %198 = vmatprep.subr.mxu0 0.0
  %199 = vmatpush1.msra.mxu0 0.0
  %200 = vmatprep.mubr.f32.mxu0 0.0
  %201 = vmatmul.mubr.f32.gmra.mrb[0].mxu0 %v134
  %v202 = vpop.f32.mrb[0].mxu0
  %v203 = vadd.f32 0.0, %v202
  %v204 = vpop.f32.mrb[0].mxu0
  %205 = vdwg.mxu0
  %v206 = vmul.f32 %v130, 0.015625
  %v207 = vmul.f32 %v203, 0.015625
  %v208 = vmul.f32 %v206, %v206
  %v209 = vsub.f32 %v207, %v208
  %v210 = vld [vmem:[%s3] sm:$0x1]
  %v211 = vadd.f32 %v209, 1e-05
  %v212 = vrsqrt.pop %v211
  %v213 = vmul.f32 %v210, %v212
  %v214 = vld [vmem:[%s4] sm:$0x1]
  %v215 = vmul.f32 %v206, %v213
  %v216 = vsub.f32 %v214, %v215
  %v217 = vld [vmem:[%s2] sm:$0xf]
  %vm218 = vcmask 31744
  %v220 = vsel %vm218, %v213, 0
  %vm222 = vcmask 1043456
  %v224 = vsel %vm222, %v217, 0
  %226 = vmatprep.subr.mxu0 0.0
  %227 = vmatpush1.msra.mxu0 %v224
  %228 = vmatprep.subr.mxu0 0.0
  %229 = vmatpush1.msra.mxu0 0.0
  %230 = vmatprep.subr.mxu0 0.0
  %231 = vmatpush1.msra.mxu0 0.0
  %232 = vmatprep.subr.mxu0 0.0
  %233 = vmatpush1.msra.mxu0 0.0
  %234 = vmatprep.subr.mxu0 0.0
  %235 = vmatpush1.msra.mxu0 0.0
  %236 = vmatprep.subr.mxu0 0.0
  %237 = vmatpush1.msra.mxu0 0.0
  %238 = vmatprep.subr.mxu0 0.0
  %239 = vmatpush1.msra.mxu0 0.0
  %240 = vmatprep.subr.mxu0 0.0
  %241 = vmatpush1.msra.mxu0 0.0
  %242 = vmatprep.subr.mxu0 0.0
  %243 = vmatpush1.msra.mxu0 0.0
  %244 = vmatprep.subr.mxu0 0.0
  %245 = vmatpush1.msra.mxu0 0.0
  %246 = vmatprep.subr.mxu0 0.0
  %247 = vmatpush1.msra.mxu0 0.0
  %248 = vmatprep.subr.mxu0 0.0
  %249 = vmatpush1.msra.mxu0 0.0
  %250 = vmatprep.subr.mxu0 0.0
  %251 = vmatpush1.msra.mxu0 0.0
  %252 = vmatprep.subr.mxu0 0.0
  %253 = vmatpush1.msra.mxu0 0.0
  %254 = vmatprep.subr.mxu0 0.0
  %255 = vmatpush1.msra.mxu0 0.0
  %256 = vmatprep.subr.mxu0 0.0
  %257 = vmatpush1.msra.mxu0 0.0
  %258 = vmatprep.subr.mxu0 0.0
  %259 = vmatpush1.msra.mxu0 0.0
  %260 = vmatprep.subr.mxu0 0.0
  %261 = vmatpush1.msra.mxu0 0.0
  %262 = vmatprep.subr.mxu0 0.0
  %263 = vmatpush1.msra.mxu0 0.0
  %264 = vmatprep.subr.mxu0 0.0
  %265 = vmatpush1.msra.mxu0 0.0
  %266 = vmatprep.subr.mxu0 0.0
  %267 = vmatpush1.msra.mxu0 0.0
  %268 = vmatprep.subr.mxu0 0.0
  %269 = vmatpush1.msra.mxu0 0.0
  %270 = vmatprep.subr.mxu0 0.0
  %271 = vmatpush1.msra.mxu0 0.0
  %272 = vmatprep.subr.mxu0 0.0
  %273 = vmatpush1.msra.mxu0 0.0
  %274 = vmatprep.subr.mxu0 0.0
  %275 = vmatpush1.msra.mxu0 0.0
  %276 = vmatprep.subr.mxu0 0.0
  %277 = vmatpush1.msra.mxu0 0.0
  %278 = vmatprep.subr.mxu0 0.0
  %279 = vmatpush1.msra.mxu0 0.0
  %280 = vmatprep.subr.mxu0 0.0
  %281 = vmatpush1.msra.mxu0 0.0
  %282 = vmatprep.subr.mxu0 0.0
  %283 = vmatpush1.msra.mxu0 0.0
  %284 = vmatprep.subr.mxu0 0.0
  %285 = vmatpush1.msra.mxu0 0.0
  %286 = vmatprep.subr.mxu0 0.0
  %287 = vmatpush1.msra.mxu0 0.0
  %288 = vmatprep.subr.mxu0 0.0
  %289 = vmatpush1.msra.mxu0 0.0
  %290 = vmatprep.mubr.f32.mxu0 0.0
  %291 = vmatmul.mubr.f32.gmra.mrb[0].mxu0 %v220
  %v292 = vpop.f32.mrb[0].mxu0
  %v293 = vadd.f32 0.0, %v292
  %v294 = vpop.f32.mrb[0].mxu0
  %295 = vdwg.mxu0
  %v297 = vsel %vm218, %v216, 0
  %299 = vmatprep.subr.mxu0 0.0
  %300 = vmatpush1.msra.mxu0 %v224
  %301 = vmatprep.subr.mxu0 0.0
  %302 = vmatpush1.msra.mxu0 0.0
  %303 = vmatprep.subr.mxu0 0.0
  %304 = vmatpush1.msra.mxu0 0.0
  %305 = vmatprep.subr.mxu0 0.0
  %306 = vmatpush1.msra.mxu0 0.0
  %307 = vmatprep.subr.mxu0 0.0
  %308 = vmatpush1.msra.mxu0 0.0
  %309 = vmatprep.subr.mxu0 0.0
  %310 = vmatpush1.msra.mxu0 0.0
  %311 = vmatprep.subr.mxu0 0.0
  %312 = vmatpush1.msra.mxu0 0.0
  %313 = vmatprep.subr.mxu0 0.0
  %314 = vmatpush1.msra.mxu0 0.0
  %315 = vmatprep.subr.mxu0 0.0
  %316 = vmatpush1.msra.mxu0 0.0
  %317 = vmatprep.subr.mxu0 0.0
  %318 = vmatpush1.msra.mxu0 0.0
  %319 = vmatprep.subr.mxu0 0.0
  %320 = vmatpush1.msra.mxu0 0.0
  %321 = vmatprep.subr.mxu0 0.0
  %322 = vmatpush1.msra.mxu0 0.0
  %323 = vmatprep.subr.mxu0 0.0
  %324 = vmatpush1.msra.mxu0 0.0
  %325 = vmatprep.subr.mxu0 0.0
  %326 = vmatpush1.msra.mxu0 0.0
  %327 = vmatprep.subr.mxu0 0.0
  %328 = vmatpush1.msra.mxu0 0.0
  %329 = vmatprep.subr.mxu0 0.0
  %330 = vmatpush1.msra.mxu0 0.0
  %331 = vmatprep.subr.mxu0 0.0
  %332 = vmatpush1.msra.mxu0 0.0
  %333 = vmatprep.subr.mxu0 0.0
  %334 = vmatpush1.msra.mxu0 0.0
  %335 = vmatprep.subr.mxu0 0.0
  %336 = vmatpush1.msra.mxu0 0.0
  %337 = vmatprep.subr.mxu0 0.0
  %338 = vmatpush1.msra.mxu0 0.0
  %339 = vmatprep.subr.mxu0 0.0
  %340 = vmatpush1.msra.mxu0 0.0
  %341 = vmatprep.subr.mxu0 0.0
  %342 = vmatpush1.msra.mxu0 0.0
  %343 = vmatprep.subr.mxu0 0.0
  %344 = vmatpush1.msra.mxu0 0.0
  %345 = vmatprep.subr.mxu0 0.0
  %346 = vmatpush1.msra.mxu0 0.0
  %347 = vmatprep.subr.mxu0 0.0
  %348 = vmatpush1.msra.mxu0 0.0
  %349 = vmatprep.subr.mxu0 0.0
  %350 = vmatpush1.msra.mxu0 0.0
  %351 = vmatprep.subr.mxu0 0.0
  %352 = vmatpush1.msra.mxu0 0.0
  %353 = vmatprep.subr.mxu0 0.0
  %354 = vmatpush1.msra.mxu0 0.0
  %355 = vmatprep.subr.mxu0 0.0
  %356 = vmatpush1.msra.mxu0 0.0
  %357 = vmatprep.subr.mxu0 0.0
  %358 = vmatpush1.msra.mxu0 0.0
  %359 = vmatprep.subr.mxu0 0.0
  %360 = vmatpush1.msra.mxu0 0.0
  %361 = vmatprep.subr.mxu0 0.0
  %362 = vmatpush1.msra.mxu0 0.0
  %363 = vmatprep.mubr.f32.mxu0 0.0
  %364 = vmatmul.mubr.f32.gmra.mrb[0].mxu0 %v297
  %v365 = vpop.f32.mrb[0].mxu0
  %v366 = vadd.f32 0.0, %v365
  %v367 = vpop.f32.mrb[0].mxu0
  %368 = vdwg.mxu0
  %v369 = vlaneseq
  %v370 = vshrl.u32 %v369, 7
  %v371 = vsub.s32 0, %v370
  %v372 = vrot.slane %v293, %v371
  %v373 = vmul.f32 %v39, %v372
  %v374 = vlaneseq
  %v375 = vshrl.u32 %v374, 7
  %v376 = vsub.s32 0, %v375
  %v377 = vrot.slane %v366, %v376
  %v378 = vadd.f32 %v373, %v377
  %v379 = vld [vmem:[%s5] sm:$0xf]
  %v380 = vld [vmem:[%s5 + $0x4] sm:$0xf]
  %v381 = vld [vmem:[%s5 + $0x8] sm:$0xf]
  %v382 = vld [vmem:[%s5 + $0xc] sm:$0xf]
  %v383 = vld [vmem:[%s6] sm:$0x1]
  %v384 = vpack.c.bf16 %v378, %v378
  %v386 = vlaneseq
  %v387 = vshrl.u32 %v386, 7
  %v388 = vsub.s32 0, %v387
  %v389 = vrot.slane %v383, %v388
  %v395 = vunpack.c.l.b16 %v379
  %v396 = vunpack.c.l.b16 %v380
  %v397 = vunpack.c.l.b16 %v381
  %v398 = vunpack.c.l.b16 %v382
  %v399 = vpack.c.b16 %v396, %v395
  %v400 = vpack.c.b16 %v398, %v397
  %v404 = vsel %vm40, %v384, 0
  %406 = vmatprep.subr.bf16.mxu0 0
  %407 = vmatpush1.bf16.msra.mxu0 %v399
  %408 = vmatprep.subr.bf16.mxu0 0
  %409 = vmatpush1.bf16.msra.mxu0 %v400
  %410 = vmatprep.subr.bf16.mxu0 0
  %411 = vmatpush1.bf16.msra.mxu0 0
  %412 = vmatprep.subr.bf16.mxu0 0
  %413 = vmatpush1.bf16.msra.mxu0 0
  %414 = vmatprep.subr.bf16.mxu0 0
  %415 = vmatpush1.bf16.msra.mxu0 0
  %416 = vmatprep.subr.bf16.mxu0 0
  %417 = vmatpush1.bf16.msra.mxu0 0
  %418 = vmatprep.subr.bf16.mxu0 0
  %419 = vmatpush1.bf16.msra.mxu0 0
  %420 = vmatprep.subr.bf16.mxu0 0
  %421 = vmatpush1.bf16.msra.mxu0 0
  %422 = vmatprep.subr.bf16.mxu0 0
  %423 = vmatpush1.bf16.msra.mxu0 0
  %424 = vmatprep.subr.bf16.mxu0 0
  %425 = vmatpush1.bf16.msra.mxu0 0
  %426 = vmatprep.subr.bf16.mxu0 0
  %427 = vmatpush1.bf16.msra.mxu0 0
  %428 = vmatprep.subr.bf16.mxu0 0
  %429 = vmatpush1.bf16.msra.mxu0 0
  %430 = vmatprep.subr.bf16.mxu0 0
  %431 = vmatpush1.bf16.msra.mxu0 0
  %432 = vmatprep.subr.bf16.mxu0 0
  %433 = vmatpush1.bf16.msra.mxu0 0
  %434 = vmatprep.subr.bf16.mxu0 0
  %435 = vmatpush1.bf16.msra.mxu0 0
  %436 = vmatprep.subr.bf16.mxu0 0
  %437 = vmatpush1.bf16.msra.mxu0 0
  %438 = vmatprep.mubr.bf16.mxu0 0
  %439 = vmatmul.mubr.bf16.gmra.mrb[0].mxu0 %v404
  %v440 = vpop.f32.mrb[0].mxu0
  %v441 = vadd.f32 %v389, %v440
  %v442 = vpop.f32.mrb[0].mxu0
  %v443 = vpop.f32.mrb[0].mxu0
  %v444 = vpop.f32.mrb[0].mxu0
  %445 = vdwg.mxu0
  %v446 = vtanh.pop %v441
  %v447 = vld [vmem:[%s7] sm:$0xf]
  %v448 = vld [vmem:[%s7 + $0x4] sm:$0xf]
  %v449 = vld [vmem:[%s7 + $0x8] sm:$0xf]
  %v450 = vld [vmem:[%s7 + $0xc] sm:$0xf]
  %v451 = vld [vmem:[%s8] sm:$0x1]
  %v452 = vpack.c.bf16 %v446, %v446
  %v454 = vlaneseq
  %v455 = vshrl.u32 %v454, 7
  %v456 = vsub.s32 0, %v455
  %v457 = vrot.slane %v451, %v456
  %v463 = vunpack.c.l.b16 %v447
  %v464 = vunpack.c.l.b16 %v448
  %v465 = vunpack.c.l.b16 %v449
  %v466 = vunpack.c.l.b16 %v450
  %v467 = vpack.c.b16 %v464, %v463
  %v468 = vpack.c.b16 %v466, %v465
  %v472 = vsel %vm40, %v452, 0
  %474 = vmatprep.subr.bf16.mxu0 0
  %475 = vmatpush1.bf16.msra.mxu0 %v467
  %476 = vmatprep.subr.bf16.mxu0 0
  %477 = vmatpush1.bf16.msra.mxu0 %v468
  %478 = vmatprep.subr.bf16.mxu0 0
  %479 = vmatpush1.bf16.msra.mxu0 0
  %480 = vmatprep.subr.bf16.mxu0 0
  %481 = vmatpush1.bf16.msra.mxu0 0
  %482 = vmatprep.subr.bf16.mxu0 0
  %483 = vmatpush1.bf16.msra.mxu0 0
  %484 = vmatprep.subr.bf16.mxu0 0
  %485 = vmatpush1.bf16.msra.mxu0 0
  %486 = vmatprep.subr.bf16.mxu0 0
  %487 = vmatpush1.bf16.msra.mxu0 0
  %488 = vmatprep.subr.bf16.mxu0 0
  %489 = vmatpush1.bf16.msra.mxu0 0
  %490 = vmatprep.subr.bf16.mxu0 0
  %491 = vmatpush1.bf16.msra.mxu0 0
  %492 = vmatprep.subr.bf16.mxu0 0
  %493 = vmatpush1.bf16.msra.mxu0 0
  %494 = vmatprep.subr.bf16.mxu0 0
  %495 = vmatpush1.bf16.msra.mxu0 0
  %496 = vmatprep.subr.bf16.mxu0 0
  %497 = vmatpush1.bf16.msra.mxu0 0
  %498 = vmatprep.subr.bf16.mxu0 0
  %499 = vmatpush1.bf16.msra.mxu0 0
  %500 = vmatprep.subr.bf16.mxu0 0
  %501 = vmatpush1.bf16.msra.mxu0 0
  %502 = vmatprep.subr.bf16.mxu0 0
  %503 = vmatpush1.bf16.msra.mxu0 0
  %504 = vmatprep.subr.bf16.mxu0 0
  %505 = vmatpush1.bf16.msra.mxu0 0
  %506 = vmatprep.mubr.bf16.mxu0 0
  %507 = vmatmul.mubr.bf16.gmra.mrb[0].mxu0 %v472
  %v508 = vpop.f32.mrb[0].mxu0
  %v509 = vadd.f32 %v457, %v508
  %v510 = vpop.f32.mrb[0].mxu0
  %v511 = vpop.f32.mrb[0].mxu0
  %v512 = vpop.f32.mrb[0].mxu0
  %513 = vdwg.mxu0
  %v514 = vmax.f32 %v509, 0.0
  %v515 = vld [vmem:[%s9] sm:$0xf]
  %v516 = vld [vmem:[%s9 + $0x4] sm:$0xf]
  %v517 = vld [vmem:[%s10] sm:$0x1]
  %v518 = vpack.c.bf16 %v514, %v514
  %v520 = vlaneseq
  %v521 = vshrl.u32 %v520, 7
  %v522 = vsub.s32 0, %v521
  %v523 = vrot.slane %v517, %v522
  %v527 = vunpack.c.l.b16 %v515
  %v528 = vunpack.c.l.b16 %v516
  %v529 = vpack.c.b16 %v528, %v527
  %vm531 = vcmask 130048
  %v533 = vsel %vm531, %v518, 0
  %535 = vmatprep.subr.bf16.mxu0 0
  %536 = vmatpush1.bf16.msra.mxu0 %v529
  %537 = vmatprep.subr.bf16.mxu0 0
  %538 = vmatpush1.bf16.msra.mxu0 0
  %539 = vmatprep.subr.bf16.mxu0 0
  %540 = vmatpush1.bf16.msra.mxu0 0
  %541 = vmatprep.subr.bf16.mxu0 0
  %542 = vmatpush1.bf16.msra.mxu0 0
  %543 = vmatprep.subr.bf16.mxu0 0
  %544 = vmatpush1.bf16.msra.mxu0 0
  %545 = vmatprep.subr.bf16.mxu0 0
  %546 = vmatpush1.bf16.msra.mxu0 0
  %547 = vmatprep.subr.bf16.mxu0 0
  %548 = vmatpush1.bf16.msra.mxu0 0
  %549 = vmatprep.subr.bf16.mxu0 0
  %550 = vmatpush1.bf16.msra.mxu0 0
  %551 = vmatprep.subr.bf16.mxu0 0
  %552 = vmatpush1.bf16.msra.mxu0 0
  %553 = vmatprep.subr.bf16.mxu0 0
  %554 = vmatpush1.bf16.msra.mxu0 0
  %555 = vmatprep.subr.bf16.mxu0 0
  %556 = vmatpush1.bf16.msra.mxu0 0
  %557 = vmatprep.subr.bf16.mxu0 0
  %558 = vmatpush1.bf16.msra.mxu0 0
  %559 = vmatprep.subr.bf16.mxu0 0
  %560 = vmatpush1.bf16.msra.mxu0 0
  %561 = vmatprep.subr.bf16.mxu0 0
  %562 = vmatpush1.bf16.msra.mxu0 0
  %563 = vmatprep.subr.bf16.mxu0 0
  %564 = vmatpush1.bf16.msra.mxu0 0
  %565 = vmatprep.subr.bf16.mxu0 0
  %566 = vmatpush1.bf16.msra.mxu0 0
  %567 = vmatprep.mubr.bf16.mxu0 0
  %568 = vmatmul.mubr.bf16.gmra.mrb[0].mxu0 %v533
  %v569 = vpop.f32.mrb[0].mxu0
  %v570 = vadd.f32 %v523, %v569
  %v571 = vpop.f32.mrb[0].mxu0
  %v572 = vpop.f32.mrb[0].mxu0
  %v573 = vpop.f32.mrb[0].mxu0
  %574 = vdwg.mxu0
  %575 = vst [vmem:[%s11] sm:$0xff] %v570
  // Predicated region
  $region46: #{encoder_forward.1} parent=0 // pred_check
    _
  $region47: #{encoder_forward.1} parent=0 // pred_check_branch
    %577 = sbr.rel (0) target = $region49
  $region48: #{encoder_forward.1} parent=0 // pred_region
    _
  $region49: #{encoder_forward.1} parent=0 // pred_fallthru
    _
  // Predicated region
  $region50: #{encoder_forward.1} parent=0 // pred_check
    _
  $region51: #{encoder_forward.1} parent=0 // pred_check_branch
    %579 = sbr.rel (0) target = $region53
  $region52: #{encoder_forward.1} parent=0 // pred_region
    _
  $region53: #{encoder_forward.1} parent=0 // pred_fallthru
    _

</llo_original>
